<compile_context>
chip_gen: v7x
topology: tpu7x:2x2x1
jax: 0.10.0
libtpu: 0.0.40
codegen_flags: <defaults>
</compile_context>

<pallas_src>
import functools
import math

import jax
import jax.numpy as jnp
from jax import lax
from jax.experimental import pallas as pl
from jax.experimental.pallas import tpu as pltpu


# ---------------------------------------------------------------------------
# FusedLeakyReLU: out = leaky_relu(x + bias[None, :, None, None]) * scale
# ---------------------------------------------------------------------------
def _fused_leaky_relu_kernel(b_ref, x_ref, o_ref, *, negative_slope, scale):
    # b_ref is either (r_blk, 1) (per-row bias column) or (1, c_blk)
    # (lane-vector bias); broadcasting handles both layouts.
    y = x_ref[...] + b_ref[...]
    pos = jnp.asarray(scale, y.dtype)
    neg = jnp.asarray(negative_slope * scale, y.dtype)
    # sqrt(2) gain folded into the select: one select + one mul per element.
    # (Numerics: differs from add -> slope-mul -> scale-mul by ~1 ulp in bf16.)
    o_ref[...] = (y * jnp.where(y >= 0, pos, neg)).astype(o_ref.dtype)


def _round_up(a, m):
    return (a + m - 1) // m * m


def _sublane_multiple(itemsize):
    # Native packed sublane tile: 8 for f32, 16 for bf16, 32 for int8/fp8.
    return max(8, 32 // itemsize)


def _pick_tiles(rows, cols, itemsize, sub, target_block_bytes, row_bias):
    """Pick (r_blk, c_blk): ~target-byte x tiles, (sub,128)-aligned or full-dim."""
    elems_target = max(1, target_block_bytes // itemsize)
    # Lanes the bias column occupies per row once padded to 128 (row path).
    bias_pad_cols = 128 if row_bias else 0
    if cols > elems_target:
        # Very wide rows: tile the lane dimension as well.
        r_blk = rows if rows < sub else sub
        c_blk = max(128, (elems_target // max(r_blk, 1)) // 128 * 128)
        c_blk = min(c_blk, cols)
    else:
        # Full lane width (always layout legal, lane dense); fuse rows.
        c_blk = cols
        r_blk = max(1, elems_target // (cols + bias_pad_cols))
        if r_blk >= rows:
            r_blk = rows
        else:
            r_blk = max(sub, (r_blk // sub) * sub)
    # v7x has 2 TensorCores: make sure a "parallel" grid axis has >= 2 blocks
    # when the tensor is big enough to amortise the extra per-step overhead.
    if (pl.cdiv(rows, r_blk) == 1 and pl.cdiv(cols, c_blk) == 1
            and rows * cols * itemsize >= (1 << 20)):
        if rows >= 2 * sub:
            r_blk = min(rows, _round_up(pl.cdiv(rows, 2), sub))
        elif cols >= 2 * 128:
            c_blk = min(cols, _round_up(pl.cdiv(cols, 2), 128))
    return r_blk, c_blk


def _padded_block_bytes(r, c, itemsize, sub):
    return _round_up(r, sub) * _round_up(c, 128) * itemsize


def fused_leaky_relu(x, bias, negative_slope=0.2, scale=2.0 ** 0.5,
                     target_block_bytes=4 << 20):
    """x: (N, C, H, W); bias: (C,). Returns leaky_relu(x + bias) * scale."""
    N, C, H, W = x.shape
    assert bias.shape == (C,)
    itemsize = jnp.dtype(x.dtype).itemsize
    sub = _sublane_multiple(itemsize)

    if H * W >= 128:
        # Lane-dense 2-D view: rows enumerate (n, c); lanes enumerate (h, w).
        rows, cols = N * C, H * W
        x2 = x.reshape(rows, cols)
        # Per-row bias column: row = n * C + c  ->  channel c.
        b2 = jnp.broadcast_to(bias.astype(x.dtype)[None, :], (N, C)).reshape(rows, 1)
        row_bias = True
    else:
        # Small-spatial path (4x4 / 8x8 StyleGAN layers): keep lanes dense by
        # fusing channels into the lane axis and feeding bias as a lane vector.
        rows, cols = N, C * H * W
        x2 = x.reshape(rows, cols)
        b2 = jnp.repeat(bias.astype(x.dtype), H * W).reshape(1, cols)
        row_bias = False

    r_blk, c_blk = _pick_tiles(rows, cols, itemsize, sub,
                               target_block_bytes, row_bias)
    grid = (pl.cdiv(rows, r_blk), pl.cdiv(cols, c_blk))

    if row_bias:
        b_spec = pl.BlockSpec((r_blk, 1), lambda i, j: (i, 0))
        b_blk_bytes = _padded_block_bytes(r_blk, 1, itemsize, sub)
    else:
        b_spec = pl.BlockSpec((1, c_blk), lambda i, j: (0, j))
        b_blk_bytes = _padded_block_bytes(1, c_blk, itemsize, sub)

    # Explicit VMEM budget: x + out tiles double-buffered + lane-padded bias.
    x_blk_bytes = _padded_block_bytes(r_blk, c_blk, itemsize, sub)
    needed = 2 * (2 * x_blk_bytes + b_blk_bytes)
    vmem_limit = int(min(64 << 20, max(16 << 20, needed + (4 << 20))))

    kernel = functools.partial(
        _fused_leaky_relu_kernel, negative_slope=negative_slope, scale=scale)

    cost = pl.CostEstimate(
        flops=3 * rows * cols,
        transcendentals=0,
        bytes_accessed=(2 * rows * cols + b2.size) * itemsize)

    out2 = pl.pallas_call(
        kernel,
        out_shape=jax.ShapeDtypeStruct((rows, cols), x.dtype),
        grid=grid,
        in_specs=[b_spec,
                  pl.BlockSpec((r_blk, c_blk), lambda i, j: (i, j))],
        out_specs=pl.BlockSpec((r_blk, c_blk), lambda i, j: (i, j)),
        compiler_params=pltpu.CompilerParams(
            dimension_semantics=("parallel", "parallel"),
            vmem_limit_bytes=vmem_limit),
        cost_estimate=cost,
    )(b2, x2)
    return out2.reshape(N, C, H, W)


class FusedLeakyReLU:
    """JAX/Pallas equivalent of the StyleGAN FusedLeakyReLU module."""

    def __init__(self, channel, negative_slope=0.2, scale=2.0 ** 0.5):
        self.bias = jnp.zeros((channel,), dtype=jnp.float32)
        self.negative_slope = negative_slope
        self.scale = scale

    def __call__(self, x):
        return fused_leaky_relu(x, self.bias.astype(x.dtype),
                                self.negative_slope, self.scale)


# ---------------------------------------------------------------------------
# Mapping MLP (Decoder_kkk2.mapping):
#   PixelNorm -> [Linear -> LeakyReLU(0.2) -> PixelNorm] x (n-1)
#             -> Linear -> PixelNorm
# fused into a single Pallas kernel (weights + activations fit in VMEM).
# ---------------------------------------------------------------------------
def _mapping_mlp_kernel(*refs, latent_dim, negative_slope):
    x_ref, o_ref = refs[0], refs[-1]
    wb = refs[1:-1]
    n_layers = len(wb) // 2

    def pixel_norm(v, n_feat):
        ms = jnp.sum(v * v, axis=1, keepdims=True) * (1.0 / n_feat)
        return v * lax.rsqrt(ms + 1e-5)

    # Input is zero-padded on the lane axis to 128; use the true latent_dim as
    # the PixelNorm divisor (padded lanes contribute 0 to the sum).
    h = pixel_norm(x_ref[...].astype(jnp.float32), latent_dim)
    for li in range(n_layers):
        w = wb[2 * li][...]
        b = wb[2 * li + 1][...]
        h = jnp.dot(h, w, preferred_element_type=jnp.float32) + b
        if li < n_layers - 1:
            h = jnp.where(h >= 0, h, h * negative_slope)
        h = pixel_norm(h, h.shape[1])
    o_ref[...] = h.astype(o_ref.dtype)


class MappingMLP:
    """Pallas version of MLP(latent_dim, style_dim, n_mlp) from the spec."""

    def __init__(self, key, inc=8, dim=512, n_layers=5, negative_slope=0.2):
        self.inc, self.dim, self.n_layers = inc, dim, n_layers
        self.negative_slope = negative_slope
        self.weights, self.biases = [], []
        fan_in = inc
        for _ in range(n_layers):
            kw, kb, key = jax.random.split(key, 3)
            w = jax.random.normal(kw, (fan_in, dim), jnp.float32) / math.sqrt(fan_in)
            b = 0.1 * jax.random.normal(kb, (1, dim), jnp.float32)
            self.weights.append(w)
            self.biases.append(b)
            fan_in = dim

    def __call__(self, styles):
        bsz = styles.shape[0]
        x = styles.reshape(bsz, -1).astype(jnp.float32)
        lat = x.shape[1]
        lat_pad = _round_up(lat, 128)
        x_p = jnp.zeros((bsz, lat_pad), jnp.float32).at[:, :lat].set(x)
        w0_p = jnp.zeros((lat_pad, self.dim), jnp.float32).at[:lat, :].set(
            self.weights[0])

        operands = [x_p, w0_p, self.biases[0]]
        for w, b in zip(self.weights[1:], self.biases[1:]):
            operands.extend([w, b])

        kernel = functools.partial(
            _mapping_mlp_kernel, latent_dim=lat,
            negative_slope=self.negative_slope)
        return pl.pallas_call(
            kernel,
            out_shape=jax.ShapeDtypeStruct((bsz, self.dim), jnp.float32),
            compiler_params=pltpu.CompilerParams(vmem_limit_bytes=32 << 20),
        )(*operands)


# ---------------------------------------------------------------------------
# Pure-JAX references + tests
# ---------------------------------------------------------------------------
def _fused_lrelu_ref(x, b, slope, scale):
    y = x + b.reshape(1, -1, 1, 1).astype(x.dtype)
    return jnp.where(y >= 0, y, y * slope) * scale


def _mapping_ref(x, weights, biases, slope):
    def pn(v):
        return v * lax.rsqrt(jnp.mean(v * v, axis=1, keepdims=True) + 1e-5)
    h = pn(x)
    n = len(weights)
    for i in range(n):
        h = jnp.dot(h, weights[i], precision=lax.Precision.HIGHEST) + biases[i]
        if i < n - 1:
            h = jnp.where(h >= 0, h, h * slope)
        h = pn(h)
    return h


if __name__ == "__main__":
    key = jax.random.PRNGKey(0)

    # --- FusedLeakyReLU: module-sized small input (lane-dense row path). ---
    N, C, H, W = 2, 4, 16, 16
    kx, kb, key = jax.random.split(key, 3)
    x = jax.random.normal(kx, (N, C, H, W), dtype=jnp.float32)
    mod = FusedLeakyReLU(C)
    mod.bias = jax.random.normal(kb, (C,), dtype=jnp.float32)
    out = jax.block_until_ready(mod(x))
    ref = _fused_lrelu_ref(x, mod.bias, mod.negative_slope, mod.scale)
    assert out.shape == (N, C, H, W)
    assert jnp.allclose(out, ref, atol=1e-5), "FusedLeakyReLU mismatch (case 1)"

    # --- Small-spatial path (H*W < 128: StyleGAN 4x4 bottleneck shape). ---
    k1, k2, key = jax.random.split(key, 3)
    x_s = jax.random.normal(k1, (2, 512, 4, 4), dtype=jnp.float32)
    b_s = jax.random.normal(k2, (512,), dtype=jnp.float32)
    out_s = jax.block_until_ready(fused_leaky_relu(x_s, b_s))
    ref_s = _fused_lrelu_ref(x_s, b_s, 0.2, 2.0 ** 0.5)
    assert jnp.allclose(out_s, ref_s, atol=1e-5), "FusedLeakyReLU mismatch (4x4)"

    # --- Tiny block target: multi-step grids + masked edge blocks. ---
    for idx, shape in enumerate([(2, 5, 16, 16), (1, 3, 32, 40)]):
        k1, k2 = jax.random.split(jax.random.fold_in(key, idx + 1))
        x_t = jax.random.normal(k1, shape, dtype=jnp.float32)
        b_t = jax.random.normal(k2, (shape[1],), dtype=jnp.float32)
        out_t = jax.block_until_ready(
            fused_leaky_relu(x_t, b_t, target_block_bytes=4096))
        ref_t = _fused_lrelu_ref(x_t, b_t, 0.2, 2.0 ** 0.5)
        assert jnp.allclose(out_t, ref_t, atol=1e-5), f"mismatch (shape {shape})"

    # --- bf16: dtype-aware (16-row) sublane tiling. ---
    k1, k2, key = jax.random.split(key, 3)
    x_h = jax.random.normal(k1, (4, 8, 16, 16), dtype=jnp.bfloat16)
    b_h = jax.random.normal(k2, (8,), dtype=jnp.bfloat16)
    out_h = jax.block_until_ready(
        fused_leaky_relu(x_h, b_h, target_block_bytes=4096))
    ref_h = _fused_lrelu_ref(x_h.astype(jnp.float32), b_h.astype(jnp.float32),
                             0.2, 2.0 ** 0.5)
    assert jnp.max(jnp.abs(out_h.astype(jnp.float32) - ref_h)) < 0.15, "bf16 mismatch"

    # --- Mapping MLP (Decoder_kkk2.mapping): latent 8 -> style_dim 512. ---
    km, ks = jax.random.split(key)
    mapping = MappingMLP(km, inc=8, dim=512, n_layers=5)
    styles = jax.random.normal(ks, (2, 8), dtype=jnp.float32)
    w_out = jax.block_until_ready(mapping(styles))
    w_ref = _mapping_ref(styles, mapping.weights, mapping.biases,
                         mapping.negative_slope)
    assert w_out.shape == (2, 512)
    assert jnp.max(jnp.abs(w_out - w_ref)) < 3e-2, "MappingMLP mismatch"

    print("KERNEL_OK")
</pallas_src>

<mosaic_0001>
module attributes {stable_mosaic.version = 11 : i64} {
  func.func @_fused_leaky_relu_kernel(%arg0: i32, %arg1: i32, %arg2: memref<8x1xf32, #tpu.memory_space<vmem>>, %arg3: memref<8x256xf32, #tpu.memory_space<vmem>>, %arg4: memref<8x256xf32, #tpu.memory_space<vmem>>) attributes {dimension_semantics = [#tpu.dimension_semantics<parallel>, #tpu.dimension_semantics<parallel>], iteration_bounds = array<i64: 1, 1>, scalar_prefetch = 0 : i64, scratch_operands = 0 : i64, tpu.core_type = #tpu.core_type<tc>, window_params = [{transform_indices = @transform_0, window_bounds = array<i64: 8, 1>}, {transform_indices = @transform_1, window_bounds = array<i64: 8, 256>}, {transform_indices = @transform_2, window_bounds = array<i64: 8, 256>}]} {
    %c0 = arith.constant 0 : index
    %c0_0 = arith.constant 0 : index
    %0 = vector.load %arg3[%c0, %c0_0] : memref<8x256xf32, #tpu.memory_space<vmem>>, vector<8x256xf32>
    %c0_1 = arith.constant 0 : index
    %c0_2 = arith.constant 0 : index
    %1 = vector.load %arg2[%c0_1, %c0_2] : memref<8x1xf32, #tpu.memory_space<vmem>>, vector<8x1xf32>
    %2 = vector.broadcast %1 : vector<8x1xf32> to vector<8x256xf32>
    %3 = arith.addf %0, %2 : vector<8x256xf32>
    %cst = arith.constant 0.000000e+00 : f32
    %4 = vector.broadcast %cst : f32 to vector<8x256xf32>
    %5 = arith.cmpf oge, %3, %4 : vector<8x256xf32>
    %cst_3 = arith.constant 1.41421354 : f32
    %cst_4 = arith.constant 0.282842726 : f32
    %6 = vector.broadcast %cst_3 : f32 to vector<8x256xf32>
    %7 = vector.broadcast %cst_4 : f32 to vector<8x256xf32>
    %8 = arith.select %5, %6, %7 : vector<8x256xi1>, vector<8x256xf32>
    %9 = arith.mulf %3, %8 : vector<8x256xf32>
    %c0_5 = arith.constant 0 : index
    %c0_6 = arith.constant 0 : index
    %10 = vector.load %arg4[%c0_5, %c0_6] : memref<8x256xf32, #tpu.memory_space<vmem>>, vector<8x256xf32>
    tpu.vector_store %arg4[%c0_5, %c0_6], %9 {strides = array<i32>} : memref<8x256xf32, #tpu.memory_space<vmem>>, vector<8x256xf32>,
    return
  }
  func.func @transform_0(%arg0: i32, %arg1: i32) -> (i32, i32) {
    %c0_i32 = arith.constant 0 : i32
    %c0_i32_0 = arith.constant 0 : i32
    return %arg0, %c0_i32 : i32, i32
  }
  func.func @transform_1(%arg0: i32, %arg1: i32) -> (i32, i32) {
    %c0_i32 = arith.constant 0 : i32
    return %arg0, %arg1 : i32, i32
  }
  func.func @transform_2(%arg0: i32, %arg1: i32) -> (i32, i32) {
    %c0_i32 = arith.constant 0 : i32
    return %arg0, %arg1 : i32, i32
  }
}

</mosaic_0001>

<llo_original>
// kernel: tpu_custom_call.1
$region0: #{tpu_custom_call.1}
  #allocation0 [shape = 'u32[]', space=smem, size = 0x4, offset = 0x4, fixed_abs, tag = 'smem constant byte address 0x4 - core index']
  #allocation1 [shape = 'u32[144,128]{1,0:T(1,128)}', space=vmem, size = 0x12000, scoped, tag = 'internal scratch']
  %s0 = inlined_call_operand.vmem [shape: f32[8,1], index: 0, kind: input, shape index: {}]
  %s1 = inlined_call_operand.hbm [shape: f32[8,256], index: 1, kind: input, shape index: {}]
  %s2 = inlined_call_operand.hbm [shape: f32[8,256], index: 2, kind: output, shape index: {}]
  %s3 = sld [smem:[#allocation0]]
  $region22: #{tpu_custom_call.1} parent=0
    _
  %s5 = ssub.s32 1, %s3
  %s6 = scalar_select 0, %s5, %s3
  $region1: #{tpu_custom_call.1} parent=0
    #allocation2 [shape = 'u8[8192]{0}', space=vmem, size = 0x2000, scoped, tag = 'input window, operand 1, single buffered']
    #allocation3 [shape = 's32[1]{0}', space=sflag, size = 0x4, scoped, tag = 'scoped memory for tpu_custom_call.1']
    #allocation4 [shape = 's32[1]{0}', space=sflag, size = 0x4, scoped, tag = 'scoped memory for tpu_custom_call.1']
    #allocation5 [shape = 'u8[8192]{0}', space=vmem, size = 0x2000, scoped, tag = 'output window, operand 0, single buffered']
    %7 = vsyncpa [#allocation3], 0
    %8 = vsyncpa [#allocation4], 0
    // Predicated region
    $region2: #{tpu_custom_call.1} parent=1 // pred_check
      _
    $region3: #{tpu_custom_call.1} parent=1 // pred_check_branch
      %10 = sbr.rel (0) target = $region5
    $region4: #{tpu_custom_call.1} parent=1 // pred_region
      _
    $region5: #{tpu_custom_call.1} parent=1 // pred_fallthru
      _
    // Predicated region
    $region6: #{tpu_custom_call.1} parent=1 // pred_check
      _
    $region7: #{tpu_custom_call.1} parent=1 // pred_check_branch
      %12 = sbr.rel (0) target = $region9
    $region8: #{tpu_custom_call.1} parent=1 // pred_region
      %s14 = ssub.s32 256, 256
      %15 = vsyncadd [#allocation3], %s14
      %s17 = sshll.u32 [#allocation2], 4
      %s18 = int_to_ptr.vmem [resolvable:$true] %s17
      %20 = dma.hbm_to_vmem [thread:$0]  %s1, 256, %s18, [#allocation3]
    $region9: #{tpu_custom_call.1} parent=1 // pred_fallthru
      _
    // Predicated region
    $region10: #{tpu_custom_call.1} parent=1 // pred_check
      _
    $region11: #{tpu_custom_call.1} parent=1 // pred_check_branch
      %22 = sbr.rel (0) target = $region13
    $region12: #{tpu_custom_call.1} parent=1 // pred_region
      %23 = dma.done [#allocation3], 256
    $region13: #{tpu_custom_call.1} parent=1 // pred_fallthru
      _
    %v24 = vld [vmem:[#allocation2] sm:$0xff]
    %v25 = vld [vmem:[#allocation2 + $0x8] sm:$0xff]
    %v26 = vld [vmem:[%s0] sm:$0xff]
    %28 = vset.pattern.permute.xlu0 0
    %29 = vperm.xlu0 %28, %v26
    %v30 = vpop.permute.xlu0 %29
    %v32 = vadd.f32 %v24, %v30
    %v33 = vadd.f32 %v25, %v30
    %vm34 = vcmp.ge.f32.partialorder %v32, 0.0
    %vm35 = vcmp.ge.f32.partialorder %v33, 0.0
    %v36 = vsel %vm34, 1.4142135, 0.28284273
    %v37 = vsel %vm35, 1.4142135, 0.28284273
    %v38 = vmul.f32 %v32, %v36
    %v39 = vmul.f32 %v33, %v37
    %40 = vst [vmem:[#allocation5] sm:$0xff] %v38
    %41 = vst [vmem:[#allocation5 + $0x8] sm:$0xff] %v39
    // Predicated region
    $region14: #{tpu_custom_call.1} parent=1 // pred_check
      _
    $region15: #{tpu_custom_call.1} parent=1 // pred_check_branch
      %43 = sbr.rel (0) target = $region17
    $region16: #{tpu_custom_call.1} parent=1 // pred_region
      %s45 = ssub.s32 256, 256
      %46 = vsyncadd [#allocation4], %s45
      %s48 = sshll.u32 [#allocation5], 4
      %s49 = int_to_ptr.vmem [resolvable:$true] %s48
      %51 = dma.vmem_to_hbm [thread:$0]  %s49, 256, %s2, [#allocation4]
    $region17: #{tpu_custom_call.1} parent=1 // pred_fallthru
      _
    // Predicated region
    $region18: #{tpu_custom_call.1} parent=1 // pred_check
      _
    $region19: #{tpu_custom_call.1} parent=1 // pred_check_branch
      %53 = sbr.rel (0) target = $region21
    $region20: #{tpu_custom_call.1} parent=1 // pred_region
      %54 = dma.done [#allocation4], 256
    $region21: #{tpu_custom_call.1} parent=1 // pred_fallthru
      _
    %55 = vsyncpa [#allocation3], 1
    %56 = vsyncpa [#allocation4], 1

</llo_original>
